<compile_context>
chip_gen: v6e
topology: v6e:2x2x1
jax: 0.10.0
libtpu: 0.0.40
codegen_flags: <defaults>
</compile_context>

<pallas_src>
import functools

import jax
import jax.numpy as jnp
from jax import lax
from jax.experimental import pallas as pl
from jax.experimental.pallas import tpu as pltpu


_MAX_SEQ_BLOCK = 512  # rows per cache seq tile (~sweet spot on v5e/v6e/v7x)


def _pick_seq_block(seq_len, max_block=_MAX_SEQ_BLOCK):
    """Largest multiple-of-8 divisor of seq_len that is <= max_block.

    Falling back to the full seq length keeps every cache block exactly
    aligned, so no partial-block masking of the (aliased) cache is needed.
    """
    for b in range(min(max_block, seq_len), 7, -1):
        if seq_len % b == 0 and b % 8 == 0:
            return b
    return seq_len


# ----------------------------------------------------------------------------
# Decode path: single-token scatter into the one seq block that contains it.
# ----------------------------------------------------------------------------
def _kv_write_row_kernel(pos_ref, cache_ref, cur_ref, out_ref):
    """Write one token row into the touched cache seq-block.

    pos_ref  : SMEM (1,) int32  absolute target position in [0, S)
    cache_ref: VMEM (BLOCK_S, D) cache block containing pos (aliased in HBM)
    cur_ref  : VMEM (1, D)
    out_ref  : VMEM (BLOCK_S, D) same HBM region as cache_ref (aliased)
    """
    out_ref[...] = cache_ref[...]
    r = pos_ref[0] % cache_ref.shape[0]
    out_ref[pl.ds(r, 1), :] = cur_ref[...]


@functools.partial(jax.jit, donate_argnums=(0,))
def _kv_cache_write_row(cache, cur_row, pos):
    """cache[:, :, pos[0], :] = cur_row[:, :, 0, :] in place (cache donated)."""
    B, H, S, D = cache.shape
    bs = _pick_seq_block(S)
    # Clamp: an out-of-range position would otherwise scatter OOB in VMEM.
    pos = jnp.clip(pos.astype(jnp.int32).reshape(1), 0, S - 1)

    cache_spec = pl.BlockSpec((None, None, bs, D),
                              lambda b, h, p: (b, h, p[0] // bs, 0))
    cur_spec = pl.BlockSpec((None, None, 1, D), lambda b, h, p: (b, h, 0, 0))
    bytes_accessed = int((2 * bs + 1) * B * H * D * cache.dtype.itemsize)

    return pl.pallas_call(
        _kv_write_row_kernel,
        out_shape=jax.ShapeDtypeStruct(cache.shape, cache.dtype),
        grid_spec=pltpu.PrefetchScalarGridSpec(
            num_scalar_prefetch=1,
            grid=(B, H),
            in_specs=[cache_spec, cur_spec],
            out_specs=cache_spec,
        ),
        # operand order: (pos, cache, cur) -> cache aliases output 0
        input_output_aliases={1: 0},
        compiler_params=pltpu.CompilerParams(
            dimension_semantics=("parallel", "parallel")),
        cost_estimate=pl.CostEstimate(flops=0, transcendentals=0,
                                      bytes_accessed=bytes_accessed),
    )(pos, cache, cur_row)


def kv_cache_scatter(cache, cur, positions):
    """Functional prev.index_copy_(2, positions, cur).

    Hot path is single-token decode (T == 1).  For T > 1 rows are applied
    sequentially so duplicate positions keep index_copy_'s last-write-wins
    ordering.
    """
    positions = jnp.asarray(positions, dtype=jnp.int32).reshape(-1)
    T = cur.shape[2]
    for t in range(T):
        cache = _kv_cache_write_row(cache, cur[:, :, t:t + 1, :],
                                    positions[t:t + 1])
    return cache


# ----------------------------------------------------------------------------
# Prefill path: contiguous slab write of cur into cache rows [0, inp_seq_len).
# ----------------------------------------------------------------------------
def _kv_prefill_kernel(cache_ref, cur_ref, out_ref, *, seq_len):
    """Merge cur rows [0, seq_len) over cache seq-block `n` (bulk store)."""
    n = pl.program_id(2)
    blk = cache_ref.shape[0]
    row = lax.broadcasted_iota(jnp.int32, cache_ref.shape, 0) + n * blk
    out_ref[...] = jnp.where(row < seq_len, cur_ref[...], cache_ref[...])


@functools.partial(jax.jit, donate_argnums=(0,))
def kv_cache_prefill(cache, cur):
    """cache[:, :, :cur.shape[2], :] = cur, in place (cache buffer donated)."""
    B, H, S, D = cache.shape
    T = cur.shape[2]
    bs = _pick_seq_block(S)
    nblk = pl.cdiv(T, bs)
    pad = nblk * bs - T
    if pad:
        # Pad cur along seq so every cur block is exactly aligned; the in-kernel
        # row < seq_len mask keeps padded rows out of the cache.  Cost O(T*D).
        cur = jnp.pad(cur, ((0, 0), (0, 0), (0, pad), (0, 0)))

    spec = pl.BlockSpec((None, None, bs, D), lambda b, h, n: (b, h, n, 0))
    bytes_accessed = int(3 * nblk * bs * B * H * D * cache.dtype.itemsize)

    return pl.pallas_call(
        functools.partial(_kv_prefill_kernel, seq_len=T),
        out_shape=jax.ShapeDtypeStruct(cache.shape, cache.dtype),
        grid_spec=pltpu.PrefetchScalarGridSpec(
            num_scalar_prefetch=0,
            grid=(B, H, nblk),           # only blocks covering [0, T) are DMA'd
            in_specs=[spec, spec],
            out_specs=spec,
        ),
        input_output_aliases={0: 0},     # cache operand aliases the output
        compiler_params=pltpu.CompilerParams(
            dimension_semantics=("parallel", "parallel", "parallel")),
        cost_estimate=pl.CostEstimate(flops=0, transcendentals=0,
                                      bytes_accessed=bytes_accessed),
    )(cache, cur)


# ----------------------------------------------------------------------------
# Module port
# ----------------------------------------------------------------------------
class KVCache:
    """JAX/Pallas port of optimum.habana ... KVCache (no learnable parameters)."""

    def __init__(self):
        self.cache = None
        self.inp_seq_len = -1

    def allocate(self, inp_seq_len, dtype, shape):
        if self.cache is None or self.cache.shape != shape:
            self.inp_seq_len = inp_seq_len
            self.cache = jnp.zeros(shape, dtype=dtype)
        else:
            assert self.inp_seq_len == inp_seq_len, (
                f"inp_seq_len must be the same. self.inp_seq_len:{self.inp_seq_len} "
                f"inp_seq_len:{inp_seq_len}")
            self.cache = jnp.zeros_like(self.cache)

    def get_shape(self):
        if self.cache is None:
            return None
        return self.cache.shape

    def update(self, prev, cur, dim, idx, inp_seq_len):
        """Mirrors KVCache.update; returns (new_cache, returned_tensor)."""
        if inp_seq_len != -1:
            if prev.shape == cur.shape:
                # prev.copy_(cur); return cur
                return cur.astype(prev.dtype), cur
            if cur.shape[2] > 1 and cur.shape[2] <= prev.shape[2]:
                # prev[:, :, :inp_seq_len, :].copy_(cur); return cur
                assert dim == 2 and cur.shape[2] == inp_seq_len
                new_cache = kv_cache_prefill(prev, cur.astype(prev.dtype))
                return new_cache, cur
        if idx is not None:
            # prev.index_copy_(dim, idx - 1, cur); return prev
            assert dim == 2, "Pallas kernel implements the seq-dim (dim=2) scatter"
            # TODO(synk): general `dim` index_copy is not implemented in the kernel.
            new_cache = kv_cache_scatter(prev, cur.astype(prev.dtype), idx - 1)
            return new_cache, new_cache
        else:
            # torch.cat((prev, cur), dim=dim)
            out = jnp.concatenate((prev, cur.astype(prev.dtype)), axis=dim)
            return out, out

    def forward(self, cur, dim, idx):
        new_cache, ret = self.update(self.cache, cur, dim, idx, self.inp_seq_len)
        self.cache = new_cache
        return ret

    __call__ = forward


if __name__ == "__main__":
    key = jax.random.PRNGKey(0)
    B, H, S_MAX, D = 2, 4, 16, 32
    T_PREFILL = 8
    dtype = jnp.float32

    kv = KVCache()
    kv.allocate(inp_seq_len=T_PREFILL, dtype=dtype, shape=(B, H, S_MAX, D))

    k1, k2 = jax.random.split(key)

    # --- Prefill path: cur.shape[2] > 1 and <= cache seq len -------------------
    cur_prefill = jax.random.normal(k1, (B, H, T_PREFILL, D), dtype=dtype)
    out_prefill = kv(cur_prefill, dim=2, idx=None)
    jax.block_until_ready(out_prefill)
    jax.block_until_ready(kv.cache)

    ref_cache = jnp.zeros((B, H, S_MAX, D), dtype).at[:, :, :T_PREFILL, :].set(cur_prefill)
    assert out_prefill.shape == cur_prefill.shape
    assert jnp.allclose(out_prefill, cur_prefill)
    assert jnp.allclose(kv.cache, ref_cache)

    # --- Decode path: index_copy_ at (token_idx - 1) along dim=2 ---------------
    token_idx = jnp.array([T_PREFILL + 1], dtype=jnp.int32)   # 1-based next position
    cur_decode = jax.random.normal(k2, (B, H, 1, D), dtype=dtype)
    out_decode = kv(cur_decode, dim=2, idx=token_idx)
    jax.block_until_ready(out_decode)

    ref_cache = ref_cache.at[:, :, T_PREFILL:T_PREFILL + 1, :].set(cur_decode)
    assert out_decode.shape == (B, H, S_MAX, D)
    assert jnp.allclose(out_decode, ref_cache)
    assert jnp.allclose(kv.cache, ref_cache)

    print("KERNEL_OK")
</pallas_src>

<mosaic_0001>
module attributes {stable_mosaic.version = 11 : i64} {
  func.func @_kv_prefill_kernel(%arg0: i32, %arg1: i32, %arg2: i32, %arg3: memref<1x1x16x32xf32, #tpu.memory_space<vmem>>, %arg4: memref<1x1x16x32xf32, #tpu.memory_space<vmem>>, %arg5: memref<1x1x16x32xf32, #tpu.memory_space<vmem>>) attributes {dimension_semantics = [#tpu.dimension_semantics<parallel>, #tpu.dimension_semantics<parallel>, #tpu.dimension_semantics<parallel>], iteration_bounds = array<i64: 2, 4, 1>, scalar_prefetch = 0 : i64, scratch_operands = 0 : i64, tpu.core_type = #tpu.core_type<tc>, window_params = [{transform_indices = @transform_0, window_bounds = array<i64: 1, 1, 16, 32>}, {transform_indices = @transform_1, window_bounds = array<i64: 1, 1, 16, 32>}, {transform_indices = @transform_2, window_bounds = array<i64: 1, 1, 16, 32>}]} {
    %0 = tpu.iota {dimensions = array<i32: 0>} : vector<16x32xi32>
    %c16_i32 = arith.constant 16 : i32
    %1 = arith.muli %arg2, %c16_i32 : i32
    %2 = vector.broadcast %1 : i32 to vector<16x32xi32>
    %3 = arith.addi %0, %2 : vector<16x32xi32>
    %c8_i32 = arith.constant 8 : i32
    %4 = vector.broadcast %c8_i32 : i32 to vector<16x32xi32>
    %5 = arith.cmpi slt, %3, %4 : vector<16x32xi32>
    %c0 = arith.constant 0 : index
    %c0_0 = arith.constant 0 : index
    %c0_1 = arith.constant 0 : index
    %c0_2 = arith.constant 0 : index
    %6 = vector.load %arg4[%c0, %c0_0, %c0_1, %c0_2] : memref<1x1x16x32xf32, #tpu.memory_space<vmem>>, vector<1x1x16x32xf32>
    %7 = vector.shape_cast %6 : vector<1x1x16x32xf32> to vector<16x32xf32>
    %c0_3 = arith.constant 0 : index
    %c0_4 = arith.constant 0 : index
    %c0_5 = arith.constant 0 : index
    %c0_6 = arith.constant 0 : index
    %8 = vector.load %arg3[%c0_3, %c0_4, %c0_5, %c0_6] : memref<1x1x16x32xf32, #tpu.memory_space<vmem>>, vector<1x1x16x32xf32>
    %9 = vector.shape_cast %8 : vector<1x1x16x32xf32> to vector<16x32xf32>
    %10 = arith.select %5, %7, %9 : vector<16x32xi1>, vector<16x32xf32>
    %c0_7 = arith.constant 0 : index
    %c0_8 = arith.constant 0 : index
    %c0_9 = arith.constant 0 : index
    %c0_10 = arith.constant 0 : index
    %11 = vector.load %arg5[%c0_7, %c0_8, %c0_9, %c0_10] : memref<1x1x16x32xf32, #tpu.memory_space<vmem>>, vector<1x1x16x32xf32>
    %12 = vector.shape_cast %11 : vector<1x1x16x32xf32> to vector<16x32xf32>
    %13 = vector.shape_cast %10 : vector<16x32xf32> to vector<1x1x16x32xf32>
    tpu.vector_store %arg5[%c0_7, %c0_8, %c0_9, %c0_10], %13 {strides = array<i32>} : memref<1x1x16x32xf32, #tpu.memory_space<vmem>>, vector<1x1x16x32xf32>,
    return
  }
  func.func @transform_0(%arg0: i32, %arg1: i32, %arg2: i32) -> (i32, i32, i32, i32) {
    %c0_i32 = arith.constant 0 : i32
    %c0_i32_0 = arith.constant 0 : i32
    return %arg0, %arg1, %arg2, %c0_i32 : i32, i32, i32, i32
  }
  func.func @transform_1(%arg0: i32, %arg1: i32, %arg2: i32) -> (i32, i32, i32, i32) {
    %c0_i32 = arith.constant 0 : i32
    %c0_i32_0 = arith.constant 0 : i32
    return %arg0, %arg1, %arg2, %c0_i32 : i32, i32, i32, i32
  }
  func.func @transform_2(%arg0: i32, %arg1: i32, %arg2: i32) -> (i32, i32, i32, i32) {
    %c0_i32 = arith.constant 0 : i32
    %c0_i32_0 = arith.constant 0 : i32
    return %arg0, %arg1, %arg2, %c0_i32 : i32, i32, i32, i32
  }
}

</mosaic_0001>

<llo_original>
// kernel: kv_cache_prefill.1
$region0: #{kv_cache_prefill.1}
  #allocation0 [shape = 'u32[]', space=smem, size = 0x4, offset = 0x4, fixed_abs, tag = 'smem constant byte address 0x4 - core index']
  #allocation1 [shape = 'u32[144,128]{1,0:T(1,128)}', space=vmem, size = 0x12000, scoped, tag = 'internal scratch']
  %s0 = inlined_call_operand.hbm [shape: f32[2,4,16,32], index: 0, kind: input, shape index: {}, may-alias: {0,2}]
  %s1 = inlined_call_operand.vmem [shape: f32[2,4,16,32], index: 1, kind: input, shape index: {}]
  %s2 = inlined_call_operand.hbm [shape: f32[2,4,16,32], index: 2, kind: output, shape index: {}, may-alias: {0,2}]
  %s3 = sld [smem:[#allocation0]]
  $region45: #{kv_cache_prefill.1} parent=0
    _
  %s5 = ssub.s32 1, %s3
  %s6 = scalar_select 0, %s5, %s3
  $region1: #{kv_cache_prefill.1} parent=0
    #allocation2 [shape = 'u8[16384]{0}', space=vmem, size = 0x4000, scoped, tag = 'input window, operand 0']
    #allocation3 [shape = 's32[2]{0}', space=sflag, size = 0x8, scoped, tag = 'scoped memory for kv_cache_prefill.1']
    #allocation4 [shape = 's32[2]{0}', space=sflag, size = 0x8, scoped, tag = 'scoped memory for kv_cache_prefill.1']
    #allocation5 [shape = 'u8[16384]{0}', space=vmem, size = 0x4000, scoped, tag = 'output window, operand 0']
    %7 = vsyncpa [#allocation3], 0
    %s8 = scalar_lea.sflag [#allocation3], 1
    %9 = vsyncpa %s8, 0
    %10 = vsyncpa [#allocation4], 0
    %s11 = scalar_lea.sflag [#allocation4], 1
    %12 = vsyncpa %s11, 0
    loop: start=0, step=1, limit=10
    $region2: #{kv_cache_prefill.1} parent=1 // loop_pre_header
      _
    $region3: #{kv_cache_prefill.1} parent=1 // loop_header
      %s14 = sphi 0, %s18
      %p15 = scmp.ge.s32.totalorder %s14, 10
      %s21 = sphi 0, %s40
      %s22 = sphi 0, %s36
      %s23 = sphi 0, %s32
      %s24 = sphi 0, %s21
      %s25 = sphi 0, %s22
      %s26 = sphi 0, %s23
      %s27 = sphi 0, %s24
      %s28 = sphi 0, %s25
      %s29 = sphi 0, %s26
      %s47 = sphi 0, %s49
      %s50 = sphi 0, %s47
      %s51 = sphi 0, %s50
      %s67 = sphi 0, %s51
      %s77 = sphi 0, %s79
      %s80 = sphi 0, %s77
      %s81 = sphi 0, %s80
      %s97 = sphi 0, %s81
      %s107 = sphi 0, %s109
      %s110 = sphi 0, %s107
      %s111 = sphi 0, %s110
      %s127 = sphi 0, %s111
    $region4: #{kv_cache_prefill.1} parent=1 // loop_header_branch
      %17 = sbr.rel (%p15) target = $region8
    $region5: #{kv_cache_prefill.1} parent=1 // loop_body
      %s19 = ssub.s32 %s14, 1
      %s20 = ssub.s32 %s14, 2
      %s30 = sadd.s32 1, %s23
      %p31 = scmp.ge.s32.totalorder %s30, 1
      %s32 = scalar_select %p31, 0, %s30
      %s33 = sadd.s32 1, %s22
      %s34 = scalar_select %p31, %s33, %s22
      %p35 = scmp.ge.s32.totalorder %s34, 4
      %s36 = scalar_select %p35, 0, %s34
      %s37 = sadd.s32 1, %s21
      %s38 = scalar_select %p35, %s37, %s21
      %p39 = scmp.ge.s32.totalorder %s38, 2
      %s40 = scalar_select %p39, 0, %s38
      %s41 = ssub.s32 %s21, %s40
      %s42 = ssub.s32 %s22, %s36
      %s43 = sor.u32 %s41, %s42
      %s44 = ssub.s32 %s23, %s32
      %s45 = sor.u32 %s43, %s44
      %p46 = scmp.eq.s32.totalorder %s45, 0
      %s48 = sadd.s32 %s47, 1
      %s49 = scalar_select %p46, %s47, %s48
      %p52 = pneg %p46
      %p53 = scmp.eq.s32.totalorder %s14, 7
      %p54 = por %p52, %p53
      %p55 = scmp.ne.s32.totalorder %s47, %s50
      %p56 = scmp.eq.s32.totalorder %s14, 0
      %p57 = por %p55, %p56
      %p58 = scmp.ne.s32.totalorder %s47, %s50
      %p59 = scmp.eq.s32.totalorder %s19, 7
      %p60 = por %p58, %p59
      %p61 = scmp.ne.s32.totalorder %s50, %s51
      %p62 = scmp.eq.s32.totalorder %s19, 0
      %p63 = por %p61, %p62
      %p64 = scmp.ne.s32.totalorder %s50, %s51
      %p65 = scmp.eq.s32.totalorder %s20, 7
      %p66 = por %p64, %p65
      %p68 = scmp.ne.s32.totalorder %s51, %s67
      %p69 = scmp.eq.s32.totalorder %s20, 0
      %p70 = por %p68, %p69
      %s71 = ssub.s32 %s21, %s40
      %s72 = ssub.s32 %s22, %s36
      %s73 = sor.u32 %s71, %s72
      %s74 = ssub.s32 %s23, %s32
      %s75 = sor.u32 %s73, %s74
      %p76 = scmp.eq.s32.totalorder %s75, 0
      %s78 = sadd.s32 %s77, 1
      %s79 = scalar_select %p76, %s77, %s78
      %p82 = pneg %p76
      %p83 = scmp.eq.s32.totalorder %s14, 7
      %p84 = por %p82, %p83
      %p85 = scmp.ne.s32.totalorder %s77, %s80
      %p86 = scmp.eq.s32.totalorder %s14, 0
      %p87 = por %p85, %p86
      %p88 = scmp.ne.s32.totalorder %s77, %s80
      %p89 = scmp.eq.s32.totalorder %s19, 7
      %p90 = por %p88, %p89
      %p91 = scmp.ne.s32.totalorder %s80, %s81
      %p92 = scmp.eq.s32.totalorder %s19, 0
      %p93 = por %p91, %p92
      %p94 = scmp.ne.s32.totalorder %s80, %s81
      %p95 = scmp.eq.s32.totalorder %s20, 7
      %p96 = por %p94, %p95
      %p98 = scmp.ne.s32.totalorder %s81, %s97
      %p99 = scmp.eq.s32.totalorder %s20, 0
      %p100 = por %p98, %p99
      %s101 = ssub.s32 %s21, %s40
      %s102 = ssub.s32 %s22, %s36
      %s103 = sor.u32 %s101, %s102
      %s104 = ssub.s32 %s23, %s32
      %s105 = sor.u32 %s103, %s104
      %p106 = scmp.eq.s32.totalorder %s105, 0
      %s108 = sadd.s32 %s107, 1
      %s109 = scalar_select %p106, %s107, %s108
      %p112 = pneg %p106
      %p113 = scmp.eq.s32.totalorder %s14, 7
      %p114 = por %p112, %p113
      %p115 = scmp.ne.s32.totalorder %s107, %s110
      %p116 = scmp.eq.s32.totalorder %s14, 0
      %p117 = por %p115, %p116
      %p118 = scmp.ne.s32.totalorder %s107, %s110
      %p119 = scmp.eq.s32.totalorder %s19, 7
      %p120 = por %p118, %p119
      %p121 = scmp.ne.s32.totalorder %s110, %s111
      %p122 = scmp.eq.s32.totalorder %s19, 0
      %p123 = por %p121, %p122
      %p124 = scmp.ne.s32.totalorder %s110, %s111
      %p125 = scmp.eq.s32.totalorder %s20, 7
      %p126 = por %p124, %p125
      %p128 = scmp.ne.s32.totalorder %s111, %s127
      %p129 = scmp.eq.s32.totalorder %s20, 0
      %p130 = por %p128, %p129
      %p131 = scmp.le.s32.totalorder 1, %s14
      %p132 = scmp.lt.s32.totalorder %s14, 9
      %p133 = pnand %p131, %p132
      %p134 = pneg %p133
      // Predicated region
      $region9: #{kv_cache_prefill.1} parent=5 // pred_check
        _
      $region10: #{kv_cache_prefill.1} parent=5 // pred_check_branch
        %136 = sbr.rel (%p133) target = $region12
      $region11: #{kv_cache_prefill.1} parent=5 // pred_region
        %s137 = ssub.s32 %s14, 1
      $region12: #{kv_cache_prefill.1} parent=5 // pred_fallthru
        _
      %p138 = scmp.lt.s32.totalorder %s14, 8
      // Predicated region
      $region13: #{kv_cache_prefill.1} parent=5 // pred_check
        %p139 = pneg %p138
      $region14: #{kv_cache_prefill.1} parent=5 // pred_check_branch
        %141 = sbr.rel (%p139) target = $region16
      $region15: #{kv_cache_prefill.1} parent=5 // pred_region
        // Predicated region
        $region17: #{kv_cache_prefill.1} parent=15 // pred_check
          %p142 = pneg %p57
        $region18: #{kv_cache_prefill.1} parent=15 // pred_check_branch
          %144 = sbr.rel (%p142) target = $region20
        $region19: #{kv_cache_prefill.1} parent=15 // pred_region
          %s145 = sand.u32 %s47, 1
          %s146 = scalar_lea.sflag [#allocation3], %s145
          %s147 = sand.u32 %s47, 1
          %s148 = smul.addr %s147, 16
          %s149 = scalar_lea.vmem [#allocation2], %s148
          %s150 = smul.u32 2, %s23
          %s152 = ssub.s32 256, 256
          %153 = vsyncadd %s146, %s152
          %s154 = smul.addr %s22, 2
          %s155 = sadd.s32 %s150, %s154
          %s156 = smul.addr %s21, 8
          %s157 = sadd.s32 %s155, %s156
          %s158 = smul.addr %s157, 128
          %s159 = scalar_lea.hbm %s0, %s158
          %s160 = sshll.u32 %s149, 4
          %s161 = int_to_ptr.vmem [resolvable:$true] %s160
          %166 = dma.hbm_to_vmem [thread:$0]  %s159, 256, %s161, %s146, 128, 128, 8
        $region20: #{kv_cache_prefill.1} parent=15 // pred_fallthru
          _
        // Predicated region
        $region21: #{kv_cache_prefill.1} parent=15 // pred_check
          %p167 = pneg %p87
        $region22: #{kv_cache_prefill.1} parent=15 // pred_check_branch
          %169 = sbr.rel (%p167) target = $region24
        $region23: #{kv_cache_prefill.1} parent=15 // pred_region
          %s170 = smul.u32 2, %s23
          %p171 = scmp.lt.s32.totalorder %s21, 1
          %s172 = scalar_select %p171, %s21, 1
          %p173 = scmp.lt.s32.totalorder %s22, 3
          %s174 = scalar_select %p173, %s22, 3
          %p175 = scmp.lt.s32.totalorder %s170, 1
          %s176 = scalar_select %p175, %s170, 1
          %s177 = smul.addr %s174, 2
          %s178 = sadd.s32 %s176, %s177
          %s179 = smul.addr %s172, 8
          %s180 = sadd.s32 %s178, %s179
          %s181 = smul.addr %s180, 8
          %s182 = scalar_lea.vmem %s1, %s181
          %s183 = smul.u32 2, %s23
        $region24: #{kv_cache_prefill.1} parent=15 // pred_fallthru
          _
      $region16: #{kv_cache_prefill.1} parent=5 // pred_fallthru
        _
      %p184 = scmp.le.s32.totalorder 1, %s14
      %p185 = scmp.lt.s32.totalorder %s14, 9
      %p186 = pnand %p184, %p185
      %p187 = pneg %p186
      // Predicated region
      $region25: #{kv_cache_prefill.1} parent=5 // pred_check
        _
      $region26: #{kv_cache_prefill.1} parent=5 // pred_check_branch
        %189 = sbr.rel (%p186) target = $region28
      $region27: #{kv_cache_prefill.1} parent=5 // pred_region
        %s190 = ssub.s32 %s14, 1
        %s191 = sand.u32 %s50, 1
        %s192 = scalar_lea.sflag [#allocation3], %s191
        %s193 = sand.u32 %s50, 1
        %s194 = smul.addr %s193, 16
        %s195 = scalar_lea.vmem [#allocation2], %s194
        // Predicated region
        $region29: #{kv_cache_prefill.1} parent=27 // pred_check
          %p196 = pneg %p63
        $region30: #{kv_cache_prefill.1} parent=27 // pred_check_branch
          %198 = sbr.rel (%p196) target = $region32
        $region31: #{kv_cache_prefill.1} parent=27 // pred_region
          %199 = dma.done %s192, 256
        $region32: #{kv_cache_prefill.1} parent=27 // pred_fallthru
          _
        %s200 = sand.u32 %s50, 1
        %s201 = scalar_lea.sflag [#allocation3], %s200
        %s202 = sand.u32 %s50, 1
        %s203 = smul.addr %s202, 16
        %s204 = scalar_lea.vmem [#allocation2], %s203
        %p205 = pneg %p63
        %p206 = pneg %p60
        %s207 = smul.u32 2, %s26
        %p208 = scmp.lt.s32.totalorder %s24, 1
        %s209 = scalar_select %p208, %s24, 1
        %p210 = scmp.lt.s32.totalorder %s25, 3
        %s211 = scalar_select %p210, %s25, 3
        %p212 = scmp.lt.s32.totalorder %s207, 1
        %s213 = scalar_select %p212, %s207, 1
        %s214 = smul.addr %s211, 2
        %s215 = sadd.s32 %s213, %s214
        %s216 = smul.addr %s209, 8
        %s217 = sadd.s32 %s215, %s216
        %s218 = smul.addr %s217, 8
        %s219 = scalar_lea.vmem %s1, %s218
        %p220 = pneg %p93
        %p221 = pneg %p90
        %p222 = pneg %p123
        %p223 = pneg %p120
        %s224 = sand.u32 %s110, 1
        %s225 = scalar_lea.sflag [#allocation4], %s224
        %s226 = sand.u32 %s110, 1
        %s227 = smul.addr %s226, 16
        %s228 = scalar_lea.vmem [#allocation5], %s227
        %s229 = smul.u32 2, %s26
        %s230 = smul.u32 2, %s26
        %p231 = scmp.lt.s32.totalorder %s24, 1
        %s232 = scalar_select %p231, %s24, 1
        %p233 = scmp.lt.s32.totalorder %s25, 3
        %s234 = scalar_select %p233, %s25, 3
        %p235 = scmp.lt.s32.totalorder %s230, 1
        %s236 = scalar_select %p235, %s230, 1
        %s237 = smul.addr %s234, 2
        %s238 = sadd.s32 %s236, %s237
        %s239 = smul.addr %s232, 8
        %s240 = sadd.s32 %s238, %s239
        %s241 = smul.addr %s240, 8
        %s242 = scalar_lea.vmem %s1, %s241
        %s243 = smul.u32 2, %s26
        %s244 = smul.u32 2, %s26
        %v245 = vlaneseq
        %v246 = vshrl.u32 %v245, 7
        %v247 = vadd.s32 %v246, 8
        %s248 = smul.u32 %s26, 16
        %v249 = vstv %s248
        %v250 = vadd.s32 %v246, %v249
        %v251 = vadd.s32 %v247, %v249
        %vm252 = vcmp.lt.s32.totalorder %v250, 8
        %vm253 = vcmp.lt.s32.totalorder %v251, 8
        %v254 = vld [vmem:[%s242] sm:$0xff]
        %v255 = vld [vmem:[%s242 + $0x8] sm:$0xff]
        %v256 = vld [vmem:[%s195] sm:$0xff]
        %v257 = vld [vmem:[%s195 + $0x8] sm:$0xff]
        %v258 = vsel %vm252, %v254, %v256
        %v259 = vsel %vm253, %v255, %v257
        %vm260 = vcmask 261120
        %261 = vst.msk [vmem:[%s228] sm:$0xff] %vm260, %v258
        %262 = vst.msk [vmem:[%s228 + $0x8] sm:$0xff] %vm260, %v259
        %s263 = sand.u32 %s110, 1
        %s264 = scalar_lea.sflag [#allocation4], %s263
        %s265 = sand.u32 %s110, 1
        %s266 = smul.addr %s265, 16
        %s267 = scalar_lea.vmem [#allocation5], %s266
        // Predicated region
        $region33: #{kv_cache_prefill.1} parent=27 // pred_check
          %p268 = pneg %p120
        $region34: #{kv_cache_prefill.1} parent=27 // pred_check_branch
          %270 = sbr.rel (%p268) target = $region36
        $region35: #{kv_cache_prefill.1} parent=27 // pred_region
          %s271 = smul.u32 2, %s26
          %s273 = ssub.s32 256, 256
          %274 = vsyncadd %s264, %s273
          %s275 = smul.addr %s25, 2
          %s276 = sadd.s32 %s271, %s275
          %s277 = smul.addr %s24, 8
          %s278 = sadd.s32 %s276, %s277
          %s279 = smul.addr %s278, 128
          %s280 = scalar_lea.hbm %s2, %s279
          %s281 = sshll.u32 %s267, 4
          %s282 = int_to_ptr.vmem [resolvable:$true] %s281
          %287 = dma.vmem_to_hbm [thread:$0]  %s282, 256, %s280, %s264, 128, 128, 8
        $region36: #{kv_cache_prefill.1} parent=27 // pred_fallthru
          _
      $region28: #{kv_cache_prefill.1} parent=5 // pred_fallthru
        _
      %p288 = scmp.le.s32.totalorder 2, %s14
      // Predicated region
      $region37: #{kv_cache_prefill.1} parent=5 // pred_check
        %p289 = pneg %p288
      $region38: #{kv_cache_prefill.1} parent=5 // pred_check_branch
        %291 = sbr.rel (%p289) target = $region40
      $region39: #{kv_cache_prefill.1} parent=5 // pred_region
        %s292 = ssub.s32 %s14, 2
        // Predicated region
        $region41: #{kv_cache_prefill.1} parent=39 // pred_check
          %p293 = pneg %p126
        $region42: #{kv_cache_prefill.1} parent=39 // pred_check_branch
          %295 = sbr.rel (%p293) target = $region44
        $region43: #{kv_cache_prefill.1} parent=39 // pred_region
          %s296 = sand.u32 %s111, 1
          %s297 = scalar_lea.sflag [#allocation4], %s296
          %s298 = sand.u32 %s111, 1
          %s299 = smul.addr %s298, 16
          %s300 = scalar_lea.vmem [#allocation5], %s299
          %301 = dma.done %s297, 256
        $region44: #{kv_cache_prefill.1} parent=39 // pred_fallthru
          _
      $region40: #{kv_cache_prefill.1} parent=5 // pred_fallthru
        _
    $region6: #{kv_cache_prefill.1} parent=1 // loop_footer
      %s18 = sadd.s32 1, %s14
    $region7: #{kv_cache_prefill.1} parent=1 // loop_footer_branch
      %13 = sbr.rel target = $region3
    $region8: #{kv_cache_prefill.1} parent=1 // loop_exit
      _
    %302 = vsyncpa [#allocation3], 1
    %s303 = scalar_lea.sflag [#allocation3], 1
    %304 = vsyncpa %s303, 1
    %305 = vsyncpa [#allocation4], 1
    %s306 = scalar_lea.sflag [#allocation4], 1
    %307 = vsyncpa %s306, 1

</llo_original>
